<compile_context>
chip_gen: v6e
topology: v6e:2x2x1
jax: 0.10.0
libtpu: 0.0.40
codegen_flags: <defaults>
</compile_context>

<pallas_src>
from functools import partial

import jax
import jax.numpy as jnp
from jax.experimental import pallas as pl
from jax.experimental.pallas import tpu as pltpu

_MIB = 1024 * 1024


def _residual_pointwise_kernel(x_ref, w_ref, b_ref, o_ref, *, use_vpu, matmul_bf16):
    """o = W @ x + b + x   (fn(x) + x fused, NCHW-native orientation).

    x_ref/o_ref: (1, C, tile_hw)   w_ref: (C, C)   b_ref: (C, 1) [f32]
    """
    x = x_ref[0]                                   # (C, tile_hw), input dtype
    b = b_ref[...]                                 # (C, 1), f32
    xf = x.astype(jnp.float32)                     # residual add always in f32

    if use_vpu:
        # Tiny-C path: unrolled VPU multiply-add; avoids pushing a degenerate
        # CxCxK matmul through the MXU result FIFO.
        w = w_ref[...].astype(jnp.float32)         # (C, C)
        c = w.shape[0]
        y = b + w[:, 0:1] * xf[0:1, :]             # (C,1)*(1,L) -> (C, L)
        for ci in range(1, c):
            y = y + w[:, ci:ci + 1] * xf[ci:ci + 1, :]
    else:
        # MXU path. Optionally bf16 operands (f32 accumulate) for large C so
        # the matmul stays hidden under the DMA instead of going MXU-bound.
        md = jnp.bfloat16 if matmul_bf16 else x_ref.dtype
        y = jnp.dot(w_ref[...].astype(md), x.astype(md),
                    preferred_element_type=jnp.float32)
        y = y + b

    o_ref[0] = (y + xf).astype(o_ref.dtype)


def residual_pointwise(x_nchw, weight, bias, *,
                       vmem_budget_bytes=None,
                       max_tile_hw=None,
                       matmul_bf16=None):
    """Residual(fn)(x) with fn = 1x1 conv. weight: (C, C), bias: (C,).

    x_nchw: (N, C, H, W) -> (N, C, H, W), computed directly in NCHW layout
    (the (N, C, H*W) view is free — no HBM transpose passes).
    """
    N, C, H, W = x_nchw.shape
    assert weight.shape == (C, C) and bias.shape == (C,)
    HW = H * W

    # Free views.
    x3 = x_nchw.reshape(N, C, HW)
    b_col = bias.reshape(C, 1).astype(jnp.float32)   # bias/residual math in f32

    itemsize = jnp.dtype(x_nchw.dtype).itemsize
    w_itemsize = jnp.dtype(weight.dtype).itemsize

    # ---- Generation-aware VMEM budget / compiler limit ----------------------
    try:
        vmem_cap = int(pltpu.get_tpu_info().vmem_capacity_bytes)
    except Exception:
        vmem_cap = 64 * _MIB          # conservative fallback (v7x per-TC VMEM)
    if vmem_budget_bytes is None:
        # ~48 MiB on 128-MiB parts (v5e/v6e), ~24 MiB on 64-MiB parts (v7x).
        vmem_budget_bytes = min(48 * _MIB, vmem_cap * 3 // 8)
    vmem_limit_bytes = int(min(vmem_cap * 3 // 4, 2 * vmem_budget_bytes))

    # ---- Compute-path selection ---------------------------------------------
    if matmul_bf16 is None:
        # Arithmetic intensity ~ C/4 flop/byte: only worth trading precision
        # for MXU rate once the f32 matmul would stop hiding under the DMA.
        matmul_bf16 = (x_nchw.dtype == jnp.float32) and C >= 512
    use_vpu = C < (8 if itemsize >= 4 else 16)

    # ---- Tile-size fit (full VMEM accounting) -------------------------------
    # Per lane column (all C channels):
    #   x + out double-buffers : 2 * 2 * C * itemsize
    #   f32 intermediates      : y (C*4) + residual upcast xf (C*4) = 8*C
    #   bf16 x copy (if used)  : 2*C
    per_lane = C * (4 * itemsize + 8 + (2 if matmul_bf16 else 0))
    # Resident weight/bias (charge 2 buffers conservatively, even though they
    # are requested single-buffered) + in-kernel weight cast copy.
    wb_bytes = 2 * (C * C + C) * w_itemsize + C * C * 4
    fit = max(128, (vmem_budget_bytes - wb_bytes) // per_lane)

    cap = fit if max_tile_hw is None else min(fit, max_tile_hw)
    if HW <= cap:
        tile_hw = HW                                 # single full-extent block
    else:
        tile_hw = max(128, (cap // 128) * 128)       # lane-dense multiple of 128
    n_hw = pl.cdiv(HW, tile_hw)                      # ragged tail masked by Pallas

    # v7x has 2 TensorCores: make sure the 'parallel' grid has >= 2 steps so a
    # single-image input doesn't leave one core idle.
    if N * n_hw < 2 and HW > 128:
        half = (HW + 1) // 2
        tile_hw = max(128, ((half + 127) // 128) * 128)
        n_hw = pl.cdiv(HW, tile_hw)

    kernel_fn = partial(_residual_pointwise_kernel,
                        use_vpu=use_vpu, matmul_bf16=matmul_bf16)

    x_spec = pl.BlockSpec((1, C, tile_hw), lambda n, s: (n, 0, s))
    # NOTE: out block shape/index must stay identical to the x block so the
    # undefined OOB lanes of a partial tile are dropped on write.
    o_spec = pl.BlockSpec((1, C, tile_hw), lambda n, s: (n, 0, s))

    def _build(single_buffer_wb):
        if single_buffer_wb:
            # Grid-invariant weight/bias: single-buffer to free VMEM for bigger
            # spatial tiles (they are never re-fetched anyway).
            w_spec = pl.BlockSpec((C, C), lambda n, s: (0, 0),
                                  pipeline_mode=pl.Buffered(1))
            b_spec = pl.BlockSpec((C, 1), lambda n, s: (0, 0),
                                  pipeline_mode=pl.Buffered(1))
        else:
            w_spec = pl.BlockSpec((C, C), lambda n, s: (0, 0))
            b_spec = pl.BlockSpec((C, 1), lambda n, s: (0, 0))
        return pl.pallas_call(
            kernel_fn,
            out_shape=jax.ShapeDtypeStruct((N, C, HW), x_nchw.dtype),
            grid_spec=pltpu.PrefetchScalarGridSpec(
                num_scalar_prefetch=0,
                grid=(N, n_hw),
                in_specs=[x_spec, w_spec, b_spec],
                out_specs=o_spec,
            ),
            compiler_params=pltpu.CompilerParams(
                dimension_semantics=("parallel", "parallel"),
                vmem_limit_bytes=vmem_limit_bytes,
            ),
        )

    try:
        out3 = _build(True)(x3, weight, b_col)
    except Exception:
        # pl.Buffered(1) not accepted by this jax version: fall back to the
        # default (double-buffered) specs — identical semantics.
        out3 = _build(False)(x3, weight, b_col)

    return out3.reshape(N, C, H, W)


if __name__ == "__main__":
    # Small shapes consistent with UNet usage: N=2, C=4, H=W=16.
    N, C, H, W = 2, 4, 16, 16
    key = jax.random.PRNGKey(0)
    kx, kw, kb = jax.random.split(key, 3)

    x = jax.random.normal(kx, (N, C, H, W), dtype=jnp.float32)
    weight = jax.random.normal(kw, (C, C), dtype=jnp.float32) * 0.1
    bias = jax.random.normal(kb, (C,), dtype=jnp.float32) * 0.1

    out = jax.block_until_ready(residual_pointwise(x, weight, bias))

    # Pure-JAX reference: fn(x) + x with fn = conv1x1, in NCHW.
    ref = (jnp.einsum("oc,nchw->nohw", weight, x)
           + bias[None, :, None, None]
           + x)

    assert out.shape == x.shape and out.dtype == x.dtype
    assert jnp.allclose(out, ref, atol=1e-5, rtol=1e-5)
    print("KERNEL_OK")
</pallas_src>

<mosaic_0001>
module attributes {stable_mosaic.version = 11 : i64} {
  func.func @_residual_pointwise_kernel(%arg0: i32, %arg1: i32, %arg2: memref<1x4x256xf32, #tpu.memory_space<vmem>>, %arg3: memref<4x4xf32, #tpu.memory_space<vmem>>, %arg4: memref<4x1xf32, #tpu.memory_space<vmem>>, %arg5: memref<1x4x256xf32, #tpu.memory_space<vmem>>) attributes {dimension_semantics = [#tpu.dimension_semantics<parallel>, #tpu.dimension_semantics<parallel>], iteration_bounds = array<i64: 2, 1>, scalar_prefetch = 0 : i64, scratch_operands = 0 : i64, tpu.core_type = #tpu.core_type<tc>, window_params = [{transform_indices = @transform_0, window_bounds = array<i64: 1, 4, 256>}, {pipeline_mode = #tpu.pipeline_mode<synchronous>, transform_indices = @transform_1, window_bounds = array<i64: 4, 4>}, {pipeline_mode = #tpu.pipeline_mode<synchronous>, transform_indices = @transform_2, window_bounds = array<i64: 4, 1>}, {transform_indices = @transform_3, window_bounds = array<i64: 1, 4, 256>}]} {
    %c0 = arith.constant 0 : index
    %c0_0 = arith.constant 0 : index
    %c0_1 = arith.constant 0 : index
    %0 = vector.load %arg2[%c0, %c0_0, %c0_1] : memref<1x4x256xf32, #tpu.memory_space<vmem>>, vector<1x4x256xf32>
    %1 = vector.shape_cast %0 : vector<1x4x256xf32> to vector<4x256xf32>
    %c0_2 = arith.constant 0 : index
    %c0_3 = arith.constant 0 : index
    %2 = vector.load %arg4[%c0_2, %c0_3] : memref<4x1xf32, #tpu.memory_space<vmem>>, vector<4x1xf32>
    %c0_4 = arith.constant 0 : index
    %c0_5 = arith.constant 0 : index
    %3 = vector.load %arg3[%c0_4, %c0_5] : memref<4x4xf32, #tpu.memory_space<vmem>>, vector<4x4xf32>
    %4 = vector.extract_strided_slice %3 {offsets = [0, 0], sizes = [4, 1], strides = [1, 1]} : vector<4x4xf32> to vector<4x1xf32>
    %5 = vector.extract_strided_slice %1 {offsets = [0, 0], sizes = [1, 256], strides = [1, 1]} : vector<4x256xf32> to vector<1x256xf32>
    %6 = vector.broadcast %4 : vector<4x1xf32> to vector<4x256xf32>
    %7 = vector.broadcast %5 : vector<1x256xf32> to vector<4x256xf32>
    %8 = arith.mulf %6, %7 : vector<4x256xf32>
    %9 = vector.broadcast %2 : vector<4x1xf32> to vector<4x256xf32>
    %10 = arith.addf %9, %8 : vector<4x256xf32>
    %11 = vector.extract_strided_slice %3 {offsets = [0, 1], sizes = [4, 1], strides = [1, 1]} : vector<4x4xf32> to vector<4x1xf32>
    %12 = vector.extract_strided_slice %1 {offsets = [1, 0], sizes = [1, 256], strides = [1, 1]} : vector<4x256xf32> to vector<1x256xf32>
    %13 = vector.broadcast %11 : vector<4x1xf32> to vector<4x256xf32>
    %14 = vector.broadcast %12 : vector<1x256xf32> to vector<4x256xf32>
    %15 = arith.mulf %13, %14 : vector<4x256xf32>
    %16 = arith.addf %10, %15 : vector<4x256xf32>
    %17 = vector.extract_strided_slice %3 {offsets = [0, 2], sizes = [4, 1], strides = [1, 1]} : vector<4x4xf32> to vector<4x1xf32>
    %18 = vector.extract_strided_slice %1 {offsets = [2, 0], sizes = [1, 256], strides = [1, 1]} : vector<4x256xf32> to vector<1x256xf32>
    %19 = vector.broadcast %17 : vector<4x1xf32> to vector<4x256xf32>
    %20 = vector.broadcast %18 : vector<1x256xf32> to vector<4x256xf32>
    %21 = arith.mulf %19, %20 : vector<4x256xf32>
    %22 = arith.addf %16, %21 : vector<4x256xf32>
    %23 = vector.extract_strided_slice %3 {offsets = [0, 3], sizes = [4, 1], strides = [1, 1]} : vector<4x4xf32> to vector<4x1xf32>
    %24 = vector.extract_strided_slice %1 {offsets = [3, 0], sizes = [1, 256], strides = [1, 1]} : vector<4x256xf32> to vector<1x256xf32>
    %25 = vector.broadcast %23 : vector<4x1xf32> to vector<4x256xf32>
    %26 = vector.broadcast %24 : vector<1x256xf32> to vector<4x256xf32>
    %27 = arith.mulf %25, %26 : vector<4x256xf32>
    %28 = arith.addf %22, %27 : vector<4x256xf32>
    %29 = arith.addf %28, %1 : vector<4x256xf32>
    %c0_6 = arith.constant 0 : index
    %c0_7 = arith.constant 0 : index
    %c0_8 = arith.constant 0 : index
    %30 = vector.load %arg5[%c0_6, %c0_7, %c0_8] : memref<1x4x256xf32, #tpu.memory_space<vmem>>, vector<1x4x256xf32>
    %31 = vector.shape_cast %30 : vector<1x4x256xf32> to vector<4x256xf32>
    %32 = vector.shape_cast %29 : vector<4x256xf32> to vector<1x4x256xf32>
    tpu.vector_store %arg5[%c0_6, %c0_7, %c0_8], %32 {strides = array<i32>} : memref<1x4x256xf32, #tpu.memory_space<vmem>>, vector<1x4x256xf32>,
    return
  }
  func.func @transform_0(%arg0: i32, %arg1: i32) -> (i32, i32, i32) {
    %c0_i32 = arith.constant 0 : i32
    %c0_i32_0 = arith.constant 0 : i32
    return %arg0, %c0_i32, %arg1 : i32, i32, i32
  }
  func.func @transform_1(%arg0: i32, %arg1: i32) -> (i32, i32) {
    %c0_i32 = arith.constant 0 : i32
    %c0_i32_0 = arith.constant 0 : i32
    %c0_i32_1 = arith.constant 0 : i32
    return %c0_i32, %c0_i32_0 : i32, i32
  }
  func.func @transform_2(%arg0: i32, %arg1: i32) -> (i32, i32) {
    %c0_i32 = arith.constant 0 : i32
    %c0_i32_0 = arith.constant 0 : i32
    %c0_i32_1 = arith.constant 0 : i32
    return %c0_i32, %c0_i32_0 : i32, i32
  }
  func.func @transform_3(%arg0: i32, %arg1: i32) -> (i32, i32, i32) {
    %c0_i32 = arith.constant 0 : i32
    %c0_i32_0 = arith.constant 0 : i32
    return %arg0, %c0_i32, %arg1 : i32, i32, i32
  }
}

module attributes {stable_mosaic.version = 11 : i64} {
  func.func @_residual_pointwise_kernel(%arg0: i32, %arg1: i32, %arg2: memref<1x4x256xf32, #tpu.memory_space<vmem>>, %arg3: memref<4x4xf32, #tpu.memory_space<vmem>>, %arg4: memref<4x1xf32, #tpu.memory_space<vmem>>, %arg5: memref<1x4x256xf32, #tpu.memory_space<vmem>>) attributes {dimension_semantics = [#tpu.dimension_semantics<parallel>, #tpu.dimension_semantics<parallel>], iteration_bounds = array<i64: 2, 1>, scalar_prefetch = 0 : i64, scratch_operands = 0 : i64, tpu.core_type = #tpu.core_type<tc>, window_params = [{transform_indices = @transform_0, window_bounds = array<i64: 1, 4, 256>}, {pipeline_mode = #tpu.pipeline_mode<synchronous>, transform_indices = @transform_1, window_bounds = array<i64: 4, 4>}, {pipeline_mode = #tpu.pipeline_mode<synchronous>, transform_indices = @transform_2, window_bounds = array<i64: 4, 1>}, {transform_indices = @transform_3, window_bounds = array<i64: 1, 4, 256>}]} {
    %c0 = arith.constant 0 : index
    %c0_0 = arith.constant 0 : index
    %c0_1 = arith.constant 0 : index
    %0 = vector.load %arg2[%c0, %c0_0, %c0_1] : memref<1x4x256xf32, #tpu.memory_space<vmem>>, vector<1x4x256xf32>
    %1 = vector.shape_cast %0 : vector<1x4x256xf32> to vector<4x256xf32>
    %c0_2 = arith.constant 0 : index
    %c0_3 = arith.constant 0 : index
    %2 = vector.load %arg4[%c0_2, %c0_3] : memref<4x1xf32, #tpu.memory_space<vmem>>, vector<4x1xf32>
    %c0_4 = arith.constant 0 : index
    %c0_5 = arith.constant 0 : index
    %3 = vector.load %arg3[%c0_4, %c0_5] : memref<4x4xf32, #tpu.memory_space<vmem>>, vector<4x4xf32>
    %4 = vector.extract_strided_slice %3 {offsets = [0, 0], sizes = [4, 1], strides = [1, 1]} : vector<4x4xf32> to vector<4x1xf32>
    %5 = vector.extract_strided_slice %1 {offsets = [0, 0], sizes = [1, 256], strides = [1, 1]} : vector<4x256xf32> to vector<1x256xf32>
    %6 = vector.broadcast %4 : vector<4x1xf32> to vector<4x256xf32>
    %7 = vector.broadcast %5 : vector<1x256xf32> to vector<4x256xf32>
    %8 = arith.mulf %6, %7 : vector<4x256xf32>
    %9 = vector.broadcast %2 : vector<4x1xf32> to vector<4x256xf32>
    %10 = arith.addf %9, %8 : vector<4x256xf32>
    %11 = vector.extract_strided_slice %3 {offsets = [0, 1], sizes = [4, 1], strides = [1, 1]} : vector<4x4xf32> to vector<4x1xf32>
    %12 = vector.extract_strided_slice %1 {offsets = [1, 0], sizes = [1, 256], strides = [1, 1]} : vector<4x256xf32> to vector<1x256xf32>
    %13 = vector.broadcast %11 : vector<4x1xf32> to vector<4x256xf32>
    %14 = vector.broadcast %12 : vector<1x256xf32> to vector<4x256xf32>
    %15 = arith.mulf %13, %14 : vector<4x256xf32>
    %16 = arith.addf %10, %15 : vector<4x256xf32>
    %17 = vector.extract_strided_slice %3 {offsets = [0, 2], sizes = [4, 1], strides = [1, 1]} : vector<4x4xf32> to vector<4x1xf32>
    %18 = vector.extract_strided_slice %1 {offsets = [2, 0], sizes = [1, 256], strides = [1, 1]} : vector<4x256xf32> to vector<1x256xf32>
    %19 = vector.broadcast %17 : vector<4x1xf32> to vector<4x256xf32>
    %20 = vector.broadcast %18 : vector<1x256xf32> to vector<4x256xf32>
    %21 = arith.mulf %19, %20 : vector<4x256xf32>
    %22 = arith.addf %16, %21 : vector<4x256xf32>
    %23 = vector.extract_strided_slice %3 {offsets = [0, 3], sizes = [4, 1], strides = [1, 1]} : vector<4x4xf32> to vector<4x1xf32>
    %24 = vector.extract_strided_slice %1 {offsets = [3, 0], sizes = [1, 256], strides = [1, 1]} : vector<4x256xf32> to vector<1x256xf32>
    %25 = vector.broadcast %23 : vector<4x1xf32> to vector<4x256xf32>
    %26 = vector.broadcast %24 : vector<1x256xf32> to vector<4x256xf32>
    %27 = arith.mulf %25, %26 : vector<4x256xf32>
    %28 = arith.addf %22, %27 : vector<4x256xf32>
    %29 = arith.addf %28, %1 : vector<4x256xf32>
    %c0_6 = arith.constant 0 : index
    %c0_7 = arith.constant 0 : index
    %c0_8 = arith.constant 0 : index
    %30 = vector.load %arg5[%c0_6, %c0_7, %c0_8] : memref<1x4x256xf32, #tpu.memory_space<vmem>>, vector<1x4x256xf32>
    %31 = vector.shape_cast %30 : vector<1x4x256xf32> to vector<4x256xf32>
    %32 = vector.shape_cast %29 : vector<4x256xf32> to vector<1x4x256xf32>
    tpu.vector_store %arg5[%c0_6, %c0_7, %c0_8], %32 {strides = array<i32>} : memref<1x4x256xf32, #tpu.memory_space<vmem>>, vector<1x4x256xf32>,
    return
  }
  func.func @transform_0(%arg0: i32, %arg1: i32) -> (i32, i32, i32) {
    %c0_i32 = arith.constant 0 : i32
    %c0_i32_0 = arith.constant 0 : i32
    return %arg0, %c0_i32, %arg1 : i32, i32, i32
  }
  func.func @transform_1(%arg0: i32, %arg1: i32) -> (i32, i32) {
    %c0_i32 = arith.constant 0 : i32
    %c0_i32_0 = arith.constant 0 : i32
    %c0_i32_1 = arith.constant 0 : i32
    return %c0_i32, %c0_i32_0 : i32, i32
  }
  func.func @transform_2(%arg0: i32, %arg1: i32) -> (i32, i32) {
    %c0_i32 = arith.constant 0 : i32
    %c0_i32_0 = arith.constant 0 : i32
    %c0_i32_1 = arith.constant 0 : i32
    return %c0_i32, %c0_i32_0 : i32, i32
  }
  func.func @transform_3(%arg0: i32, %arg1: i32) -> (i32, i32, i32) {
    %c0_i32 = arith.constant 0 : i32
    %c0_i32_0 = arith.constant 0 : i32
    return %arg0, %c0_i32, %arg1 : i32, i32, i32
  }
}

</mosaic_0001>

<llo_original>
// kernel: tpu_custom_call.1
$region0: #{tpu_custom_call.1}
  #allocation0 [shape = 'u32[]', space=smem, size = 0x4, offset = 0x4, fixed_abs, tag = 'smem constant byte address 0x4 - core index']
  #allocation1 [shape = 'u32[144,128]{1,0:T(1,128)}', space=vmem, size = 0x12000, scoped, tag = 'internal scratch']
  %s0 = inlined_call_operand.hbm [shape: f32[2,4,256], index: 0, kind: input, shape index: {}]
  %s1 = inlined_call_operand.vmem [shape: f32[4,4], index: 1, kind: input, shape index: {}]
  %s2 = inlined_call_operand.vmem [shape: f32[4,1], index: 2, kind: input, shape index: {}]
  %s3 = inlined_call_operand.hbm [shape: f32[2,4,256], index: 3, kind: output, shape index: {}]
  %s4 = sld [smem:[#allocation0]]
  $region49: #{tpu_custom_call.1} parent=0
    _
  %s6 = ssub.s32 1, %s4
  %s7 = scalar_select 0, %s6, %s4
  $region1: #{tpu_custom_call.1} parent=0
    #allocation2 [shape = 'u8[8192]{0}', space=vmem, size = 0x2000, scoped, tag = 'input window, operand 0']
    #allocation3 [shape = 's32[2]{0}', space=sflag, size = 0x8, scoped, tag = 'scoped memory for tpu_custom_call.1']
    #allocation4 [shape = 's32[2]{0}', space=sflag, size = 0x8, scoped, tag = 'scoped memory for tpu_custom_call.1']
    #allocation5 [shape = 'u8[8192]{0}', space=vmem, size = 0x2000, scoped, tag = 'output window, operand 0']
    %8 = vsyncpa [#allocation3], 0
    %s9 = scalar_lea.sflag [#allocation3], 1
    %10 = vsyncpa %s9, 0
    %11 = vsyncpa [#allocation4], 0
    %s12 = scalar_lea.sflag [#allocation4], 1
    %13 = vsyncpa %s12, 0
    loop: start=0, step=1, limit=4
    $region2: #{tpu_custom_call.1} parent=1 // loop_pre_header
      _
    $region3: #{tpu_custom_call.1} parent=1 // loop_header
      %s15 = sphi 0, %s19
      %p16 = scmp.ge.s32.totalorder %s15, 4
      %s22 = sphi 0, %s34
      %s23 = sphi 0, %s30
      %s24 = sphi 0, %s22
      %s25 = sphi 0, %s23
      %s26 = sphi 0, %s24
      %s27 = sphi 0, %s25
      %s39 = sphi 0, %s41
      %s42 = sphi 0, %s39
      %s43 = sphi 0, %s42
      %s59 = sphi 0, %s43
      %s63 = sphi 0, %s63
      %s65 = sphi 0, %s63
      %s66 = sphi 0, %s65
      %s80 = sphi 0, %s66
      %s84 = sphi 0, %s84
      %s86 = sphi 0, %s84
      %s87 = sphi 0, %s86
      %s101 = sphi 0, %s87
      %s109 = sphi 0, %s111
      %s112 = sphi 0, %s109
      %s113 = sphi 0, %s112
      %s129 = sphi 0, %s113
    $region4: #{tpu_custom_call.1} parent=1 // loop_header_branch
      %18 = sbr.rel (%p16) target = $region8
    $region5: #{tpu_custom_call.1} parent=1 // loop_body
      %s20 = ssub.s32 %s15, 1
      %s21 = ssub.s32 %s15, 2
      %s28 = sadd.s32 1, %s23
      %p29 = scmp.ge.s32.totalorder %s28, 1
      %s30 = scalar_select %p29, 0, %s28
      %s31 = sadd.s32 1, %s22
      %s32 = scalar_select %p29, %s31, %s22
      %p33 = scmp.ge.s32.totalorder %s32, 2
      %s34 = scalar_select %p33, 0, %s32
      %s35 = ssub.s32 %s22, %s34
      %s36 = ssub.s32 %s23, %s30
      %s37 = sor.u32 %s35, %s36
      %p38 = scmp.eq.s32.totalorder %s37, 0
      %s40 = sadd.s32 %s39, 1
      %s41 = scalar_select %p38, %s39, %s40
      %p44 = pneg %p38
      %p45 = scmp.eq.s32.totalorder %s15, 1
      %p46 = por %p44, %p45
      %p47 = scmp.ne.s32.totalorder %s39, %s42
      %p48 = scmp.eq.s32.totalorder %s15, 0
      %p49 = por %p47, %p48
      %p50 = scmp.ne.s32.totalorder %s39, %s42
      %p51 = scmp.eq.s32.totalorder %s20, 1
      %p52 = por %p50, %p51
      %p53 = scmp.ne.s32.totalorder %s42, %s43
      %p54 = scmp.eq.s32.totalorder %s20, 0
      %p55 = por %p53, %p54
      %p56 = scmp.ne.s32.totalorder %s42, %s43
      %p57 = scmp.eq.s32.totalorder %s21, 1
      %p58 = por %p56, %p57
      %p60 = scmp.ne.s32.totalorder %s43, %s59
      %p61 = scmp.eq.s32.totalorder %s21, 0
      %p62 = por %p60, %p61
      %s64 = sadd.s32 %s63, 1
      %p67 = scmp.eq.s32.totalorder %s15, 1
      %p68 = scmp.ne.s32.totalorder %s63, %s65
      %p69 = scmp.eq.s32.totalorder %s15, 0
      %p70 = por %p68, %p69
      %p71 = scmp.ne.s32.totalorder %s63, %s65
      %p72 = scmp.eq.s32.totalorder %s20, 1
      %p73 = por %p71, %p72
      %p74 = scmp.ne.s32.totalorder %s65, %s66
      %p75 = scmp.eq.s32.totalorder %s20, 0
      %p76 = por %p74, %p75
      %p77 = scmp.ne.s32.totalorder %s65, %s66
      %p78 = scmp.eq.s32.totalorder %s21, 1
      %p79 = por %p77, %p78
      %p81 = scmp.ne.s32.totalorder %s66, %s80
      %p82 = scmp.eq.s32.totalorder %s21, 0
      %p83 = por %p81, %p82
      %s85 = sadd.s32 %s84, 1
      %p88 = scmp.eq.s32.totalorder %s15, 1
      %p89 = scmp.ne.s32.totalorder %s84, %s86
      %p90 = scmp.eq.s32.totalorder %s15, 0
      %p91 = por %p89, %p90
      %p92 = scmp.ne.s32.totalorder %s84, %s86
      %p93 = scmp.eq.s32.totalorder %s20, 1
      %p94 = por %p92, %p93
      %p95 = scmp.ne.s32.totalorder %s86, %s87
      %p96 = scmp.eq.s32.totalorder %s20, 0
      %p97 = por %p95, %p96
      %p98 = scmp.ne.s32.totalorder %s86, %s87
      %p99 = scmp.eq.s32.totalorder %s21, 1
      %p100 = por %p98, %p99
      %p102 = scmp.ne.s32.totalorder %s87, %s101
      %p103 = scmp.eq.s32.totalorder %s21, 0
      %p104 = por %p102, %p103
      %s105 = ssub.s32 %s22, %s34
      %s106 = ssub.s32 %s23, %s30
      %s107 = sor.u32 %s105, %s106
      %p108 = scmp.eq.s32.totalorder %s107, 0
      %s110 = sadd.s32 %s109, 1
      %s111 = scalar_select %p108, %s109, %s110
      %p114 = pneg %p108
      %p115 = scmp.eq.s32.totalorder %s15, 1
      %p116 = por %p114, %p115
      %p117 = scmp.ne.s32.totalorder %s109, %s112
      %p118 = scmp.eq.s32.totalorder %s15, 0
      %p119 = por %p117, %p118
      %p120 = scmp.ne.s32.totalorder %s109, %s112
      %p121 = scmp.eq.s32.totalorder %s20, 1
      %p122 = por %p120, %p121
      %p123 = scmp.ne.s32.totalorder %s112, %s113
      %p124 = scmp.eq.s32.totalorder %s20, 0
      %p125 = por %p123, %p124
      %p126 = scmp.ne.s32.totalorder %s112, %s113
      %p127 = scmp.eq.s32.totalorder %s21, 1
      %p128 = por %p126, %p127
      %p130 = scmp.ne.s32.totalorder %s113, %s129
      %p131 = scmp.eq.s32.totalorder %s21, 0
      %p132 = por %p130, %p131
      %p133 = scmp.le.s32.totalorder 1, %s15
      %p134 = scmp.lt.s32.totalorder %s15, 3
      %p135 = pnand %p133, %p134
      %p136 = pneg %p135
      // Predicated region
      $region9: #{tpu_custom_call.1} parent=5 // pred_check
        _
      $region10: #{tpu_custom_call.1} parent=5 // pred_check_branch
        %138 = sbr.rel (%p135) target = $region12
      $region11: #{tpu_custom_call.1} parent=5 // pred_region
        %s139 = ssub.s32 %s15, 1
        // Predicated region
        $region13: #{tpu_custom_call.1} parent=11 // pred_check
          %p140 = pneg %p76
        $region14: #{tpu_custom_call.1} parent=11 // pred_check_branch
          %142 = sbr.rel (%p140) target = $region16
        $region15: #{tpu_custom_call.1} parent=11 // pred_region
          _
        $region16: #{tpu_custom_call.1} parent=11 // pred_fallthru
          _
        // Predicated region
        $region17: #{tpu_custom_call.1} parent=11 // pred_check
          %p143 = pneg %p97
        $region18: #{tpu_custom_call.1} parent=11 // pred_check_branch
          %145 = sbr.rel (%p143) target = $region20
        $region19: #{tpu_custom_call.1} parent=11 // pred_region
          _
        $region20: #{tpu_custom_call.1} parent=11 // pred_fallthru
          _
      $region12: #{tpu_custom_call.1} parent=5 // pred_fallthru
        _
      %p146 = scmp.lt.s32.totalorder %s15, 2
      // Predicated region
      $region21: #{tpu_custom_call.1} parent=5 // pred_check
        %p147 = pneg %p146
      $region22: #{tpu_custom_call.1} parent=5 // pred_check_branch
        %149 = sbr.rel (%p147) target = $region24
      $region23: #{tpu_custom_call.1} parent=5 // pred_region
        // Predicated region
        $region25: #{tpu_custom_call.1} parent=23 // pred_check
          %p150 = pneg %p49
        $region26: #{tpu_custom_call.1} parent=23 // pred_check_branch
          %152 = sbr.rel (%p150) target = $region28
        $region27: #{tpu_custom_call.1} parent=23 // pred_region
          %s153 = sand.u32 %s39, 1
          %s154 = scalar_lea.sflag [#allocation3], %s153
          %s155 = sand.u32 %s39, 1
          %s156 = smul.addr %s155, 8
          %s157 = scalar_lea.vmem [#allocation2], %s156
          %s158 = smul.u32 2, %s23
          %s160 = ssub.s32 128, 128
          %161 = vsyncadd %s154, %s160
          %s162 = smul.addr %s22, 2
          %s163 = sadd.s32 %s158, %s162
          %s164 = smul.addr %s163, 64
          %s165 = scalar_lea.hbm %s0, %s164
          %s167 = sshll.u32 %s157, 4
          %s168 = int_to_ptr.vmem [resolvable:$true] %s167
          %170 = dma.hbm_to_vmem [thread:$0]  %s165, 128, %s168, %s154
        $region28: #{tpu_custom_call.1} parent=23 // pred_fallthru
          _
      $region24: #{tpu_custom_call.1} parent=5 // pred_fallthru
        _
      %p171 = scmp.le.s32.totalorder 1, %s15
      %p172 = scmp.lt.s32.totalorder %s15, 3
      %p173 = pnand %p171, %p172
      %p174 = pneg %p173
      // Predicated region
      $region29: #{tpu_custom_call.1} parent=5 // pred_check
        _
      $region30: #{tpu_custom_call.1} parent=5 // pred_check_branch
        %176 = sbr.rel (%p173) target = $region32
      $region31: #{tpu_custom_call.1} parent=5 // pred_region
        %s177 = ssub.s32 %s15, 1
        %s178 = sand.u32 %s42, 1
        %s179 = scalar_lea.sflag [#allocation3], %s178
        %s180 = sand.u32 %s42, 1
        %s181 = smul.addr %s180, 8
        %s182 = scalar_lea.vmem [#allocation2], %s181
        // Predicated region
        $region33: #{tpu_custom_call.1} parent=31 // pred_check
          %p183 = pneg %p55
        $region34: #{tpu_custom_call.1} parent=31 // pred_check_branch
          %185 = sbr.rel (%p183) target = $region36
        $region35: #{tpu_custom_call.1} parent=31 // pred_region
          %186 = dma.done %s179, 128
        $region36: #{tpu_custom_call.1} parent=31 // pred_fallthru
          _
        %s187 = sand.u32 %s42, 1
        %s188 = scalar_lea.sflag [#allocation3], %s187
        %s189 = sand.u32 %s42, 1
        %s190 = smul.addr %s189, 8
        %s191 = scalar_lea.vmem [#allocation2], %s190
        %p192 = pneg %p55
        %p193 = pneg %p52
        %p194 = pneg %p76
        %p195 = pneg %p73
        %p196 = pneg %p97
        %p197 = pneg %p94
        %p198 = pneg %p125
        %p199 = pneg %p122
        %s200 = sand.u32 %s112, 1
        %s201 = scalar_lea.sflag [#allocation4], %s200
        %s202 = sand.u32 %s112, 1
        %s203 = smul.addr %s202, 8
        %s204 = scalar_lea.vmem [#allocation5], %s203
        %s205 = smul.u32 2, %s25
        %s206 = smul.u32 2, %s25
        %v207 = vld [vmem:[%s182] sm:$0xff]
        %v208 = vld [vmem:[%s2] sm:$0xf]
        %v209 = vld [vmem:[%s1] sm:$0xf]
        %211 = vset.pattern.permute.xlu0 0
        %212 = vperm.xlu0 %211, %v209
        %v213 = vpop.permute.xlu0 %212
        %v216 = vlaneseq
        %v217 = vshrl.u32 %v216, 7
        %v218 = vsub.s32 0, %v217
        %v219 = vrot.slane %v207, %v218
        %v220 = vlaneseq
        %v221 = vshrl.u32 %v220, 7
        %v222 = vsub.s32 4, %v221
        %v223 = vrot.slane %v207, %v222
        %v226 = vlaneseq
        %v227 = vshrl.u32 %v226, 7
        %v228 = vsub.s32 0, %v227
        %v229 = vrot.slane %v219, %v228
        %v230 = vlaneseq
        %v231 = vshrl.u32 %v230, 7
        %v232 = vsub.s32 0, %v231
        %v233 = vrot.slane %v223, %v232
        %v234 = vmul.f32 %v213, %v229
        %v235 = vmul.f32 %v213, %v233
        %237 = vset.pattern.permute.xlu0 0
        %238 = vperm.xlu0 %237, %v208
        %v239 = vpop.permute.xlu0 %238
        %v241 = vadd.f32 %v239, %v234
        %v242 = vadd.f32 %v239, %v235
        %243 = vset.pattern.permute.xlu0 1
        %244 = vperm.xlu0 %243, %v209
        %v245 = vpop.permute.xlu0 %244
        %v247 = vlaneseq
        %v248 = vshrl.u32 %v247, 7
        %v249 = vsub.s32 1, %v248
        %v250 = vrot.slane %v207, %v249
        %v251 = vlaneseq
        %v252 = vshrl.u32 %v251, 7
        %v253 = vsub.s32 5, %v252
        %v254 = vrot.slane %v207, %v253
        %v257 = vlaneseq
        %v258 = vshrl.u32 %v257, 7
        %v259 = vsub.s32 1, %v258
        %v260 = vrot.slane %v250, %v259
        %v261 = vlaneseq
        %v262 = vshrl.u32 %v261, 7
        %v263 = vsub.s32 1, %v262
        %v264 = vrot.slane %v254, %v263
        %v265 = vmul.f32 %v245, %v260
        %v266 = vmul.f32 %v245, %v264
        %v267 = vadd.f32 %v241, %v265
        %v268 = vadd.f32 %v242, %v266
        %269 = vset.pattern.permute.xlu0 2
        %270 = vperm.xlu0 %269, %v209
        %v271 = vpop.permute.xlu0 %270
        %v273 = vlaneseq
        %v274 = vshrl.u32 %v273, 7
        %v275 = vsub.s32 2, %v274
        %v276 = vrot.slane %v207, %v275
        %v277 = vlaneseq
        %v278 = vshrl.u32 %v277, 7
        %v279 = vsub.s32 6, %v278
        %v280 = vrot.slane %v207, %v279
        %v283 = vlaneseq
        %v284 = vshrl.u32 %v283, 7
        %v285 = vsub.s32 2, %v284
        %v286 = vrot.slane %v276, %v285
        %v287 = vlaneseq
        %v288 = vshrl.u32 %v287, 7
        %v289 = vsub.s32 2, %v288
        %v290 = vrot.slane %v280, %v289
        %v291 = vmul.f32 %v271, %v286
        %v292 = vmul.f32 %v271, %v290
        %v293 = vadd.f32 %v267, %v291
        %v294 = vadd.f32 %v268, %v292
        %295 = vset.pattern.permute.xlu0 3
        %296 = vperm.xlu0 %295, %v209
        %v297 = vpop.permute.xlu0 %296
        %v299 = vlaneseq
        %v300 = vshrl.u32 %v299, 7
        %v301 = vsub.s32 3, %v300
        %v302 = vrot.slane %v207, %v301
        %v303 = vlaneseq
        %v304 = vshrl.u32 %v303, 7
        %v305 = vsub.s32 7, %v304
        %v306 = vrot.slane %v207, %v305
        %v309 = vlaneseq
        %v310 = vshrl.u32 %v309, 7
        %v311 = vsub.s32 3, %v310
        %v312 = vrot.slane %v302, %v311
        %v313 = vlaneseq
        %v314 = vshrl.u32 %v313, 7
        %v315 = vsub.s32 3, %v314
        %v316 = vrot.slane %v306, %v315
        %v317 = vmul.f32 %v297, %v312
        %v318 = vmul.f32 %v297, %v316
        %v319 = vadd.f32 %v293, %v317
        %v320 = vadd.f32 %v294, %v318
        %v321 = vcombine.high %v207, %v207
        %v323 = vadd.f32 %v319, %v207
        %v324 = vadd.f32 %v320, %v321
        %v327 = vcombine.low %v323, %v324
        %329 = vst [vmem:[%s204] sm:$0xff] %v327
        %s330 = sand.u32 %s112, 1
        %s331 = scalar_lea.sflag [#allocation4], %s330
        %s332 = sand.u32 %s112, 1
        %s333 = smul.addr %s332, 8
        %s334 = scalar_lea.vmem [#allocation5], %s333
        // Predicated region
        $region37: #{tpu_custom_call.1} parent=31 // pred_check
          %p335 = pneg %p122
        $region38: #{tpu_custom_call.1} parent=31 // pred_check_branch
          %337 = sbr.rel (%p335) target = $region40
        $region39: #{tpu_custom_call.1} parent=31 // pred_region
          %s338 = smul.u32 2, %s25
          %s340 = ssub.s32 128, 128
          %341 = vsyncadd %s331, %s340
          %s342 = smul.addr %s24, 2
          %s343 = sadd.s32 %s338, %s342
          %s344 = smul.addr %s343, 64
          %s345 = scalar_lea.hbm %s3, %s344
          %s347 = sshll.u32 %s334, 4
          %s348 = int_to_ptr.vmem [resolvable:$true] %s347
          %350 = dma.vmem_to_hbm [thread:$0]  %s348, 128, %s345, %s331
        $region40: #{tpu_custom_call.1} parent=31 // pred_fallthru
          _
      $region32: #{tpu_custom_call.1} parent=5 // pred_fallthru
        _
      %p351 = scmp.le.s32.totalorder 2, %s15
      // Predicated region
      $region41: #{tpu_custom_call.1} parent=5 // pred_check
        %p352 = pneg %p351
      $region42: #{tpu_custom_call.1} parent=5 // pred_check_branch
        %354 = sbr.rel (%p352) target = $region44
      $region43: #{tpu_custom_call.1} parent=5 // pred_region
        %s355 = ssub.s32 %s15, 2
        // Predicated region
        $region45: #{tpu_custom_call.1} parent=43 // pred_check
          %p356 = pneg %p128
        $region46: #{tpu_custom_call.1} parent=43 // pred_check_branch
          %358 = sbr.rel (%p356) target = $region48
        $region47: #{tpu_custom_call.1} parent=43 // pred_region
          %s359 = sand.u32 %s113, 1
          %s360 = scalar_lea.sflag [#allocation4], %s359
          %s361 = sand.u32 %s113, 1
          %s362 = smul.addr %s361, 8
          %s363 = scalar_lea.vmem [#allocation5], %s362
          %364 = dma.done %s360, 128
        $region48: #{tpu_custom_call.1} parent=43 // pred_fallthru
          _
      $region44: #{tpu_custom_call.1} parent=5 // pred_fallthru
        _
    $region6: #{tpu_custom_call.1} parent=1 // loop_footer
      %s19 = sadd.s32 1, %s15
    $region7: #{tpu_custom_call.1} parent=1 // loop_footer_branch
      %14 = sbr.rel target = $region3
    $region8: #{tpu_custom_call.1} parent=1 // loop_exit
      _
    %365 = vsyncpa [#allocation3], 1
    %s366 = scalar_lea.sflag [#allocation3], 1
    %367 = vsyncpa %s366, 1
    %368 = vsyncpa [#allocation4], 1
    %s369 = scalar_lea.sflag [#allocation4], 1
    %370 = vsyncpa %s369, 1

// kernel: tpu_custom_call.1
$region0: #{tpu_custom_call.1}
  #allocation0 [shape = 'u32[]', space=smem, size = 0x4, offset = 0x4, fixed_abs, tag = 'smem constant byte address 0x4 - core index']
  #allocation1 [shape = 'u32[144,128]{1,0:T(1,128)}', space=vmem, size = 0x12000, scoped, tag = 'internal scratch']
  %s0 = inlined_call_operand.hbm [shape: f32[2,4,256], index: 0, kind: input, shape index: {}]
  %s1 = inlined_call_operand.vmem [shape: f32[4,4], index: 1, kind: input, shape index: {}]
  %s2 = inlined_call_operand.vmem [shape: f32[4,1], index: 2, kind: input, shape index: {}]
  %s3 = inlined_call_operand.hbm [shape: f32[2,4,256], index: 3, kind: output, shape index: {}]
  %s4 = sld [smem:[#allocation0]]
  $region49: #{tpu_custom_call.1} parent=0
    _
  %s6 = ssub.s32 1, %s4
  %s7 = scalar_select 0, %s6, %s4
  $region1: #{tpu_custom_call.1} parent=0
    #allocation2 [shape = 'u8[8192]{0}', space=vmem, size = 0x2000, scoped, tag = 'input window, operand 0']
    #allocation3 [shape = 's32[2]{0}', space=sflag, size = 0x8, scoped, tag = 'scoped memory for tpu_custom_call.1']
    #allocation4 [shape = 's32[2]{0}', space=sflag, size = 0x8, scoped, tag = 'scoped memory for tpu_custom_call.1']
    #allocation5 [shape = 'u8[8192]{0}', space=vmem, size = 0x2000, scoped, tag = 'output window, operand 0']
    %8 = vsyncpa [#allocation3], 0
    %s9 = scalar_lea.sflag [#allocation3], 1
    %10 = vsyncpa %s9, 0
    %11 = vsyncpa [#allocation4], 0
    %s12 = scalar_lea.sflag [#allocation4], 1
    %13 = vsyncpa %s12, 0
    loop: start=0, step=1, limit=4
    $region2: #{tpu_custom_call.1} parent=1 // loop_pre_header
      _
    $region3: #{tpu_custom_call.1} parent=1 // loop_header
      %s15 = sphi 0, %s19
      %p16 = scmp.ge.s32.totalorder %s15, 4
      %s22 = sphi 0, %s34
      %s23 = sphi 0, %s30
      %s24 = sphi 0, %s22
      %s25 = sphi 0, %s23
      %s26 = sphi 0, %s24
      %s27 = sphi 0, %s25
      %s39 = sphi 0, %s41
      %s42 = sphi 0, %s39
      %s43 = sphi 0, %s42
      %s59 = sphi 0, %s43
      %s63 = sphi 0, %s63
      %s65 = sphi 0, %s63
      %s66 = sphi 0, %s65
      %s80 = sphi 0, %s66
      %s84 = sphi 0, %s84
      %s86 = sphi 0, %s84
      %s87 = sphi 0, %s86
      %s101 = sphi 0, %s87
      %s109 = sphi 0, %s111
      %s112 = sphi 0, %s109
      %s113 = sphi 0, %s112
      %s129 = sphi 0, %s113
    $region4: #{tpu_custom_call.1} parent=1 // loop_header_branch
      %18 = sbr.rel (%p16) target = $region8
    $region5: #{tpu_custom_call.1} parent=1 // loop_body
      %s20 = ssub.s32 %s15, 1
      %s21 = ssub.s32 %s15, 2
      %s28 = sadd.s32 1, %s23
      %p29 = scmp.ge.s32.totalorder %s28, 1
      %s30 = scalar_select %p29, 0, %s28
      %s31 = sadd.s32 1, %s22
      %s32 = scalar_select %p29, %s31, %s22
      %p33 = scmp.ge.s32.totalorder %s32, 2
      %s34 = scalar_select %p33, 0, %s32
      %s35 = ssub.s32 %s22, %s34
      %s36 = ssub.s32 %s23, %s30
      %s37 = sor.u32 %s35, %s36
      %p38 = scmp.eq.s32.totalorder %s37, 0
      %s40 = sadd.s32 %s39, 1
      %s41 = scalar_select %p38, %s39, %s40
      %p44 = pneg %p38
      %p45 = scmp.eq.s32.totalorder %s15, 1
      %p46 = por %p44, %p45
      %p47 = scmp.ne.s32.totalorder %s39, %s42
      %p48 = scmp.eq.s32.totalorder %s15, 0
      %p49 = por %p47, %p48
      %p50 = scmp.ne.s32.totalorder %s39, %s42
      %p51 = scmp.eq.s32.totalorder %s20, 1
      %p52 = por %p50, %p51
      %p53 = scmp.ne.s32.totalorder %s42, %s43
      %p54 = scmp.eq.s32.totalorder %s20, 0
      %p55 = por %p53, %p54
      %p56 = scmp.ne.s32.totalorder %s42, %s43
      %p57 = scmp.eq.s32.totalorder %s21, 1
      %p58 = por %p56, %p57
      %p60 = scmp.ne.s32.totalorder %s43, %s59
      %p61 = scmp.eq.s32.totalorder %s21, 0
      %p62 = por %p60, %p61
      %s64 = sadd.s32 %s63, 1
      %p67 = scmp.eq.s32.totalorder %s15, 1
      %p68 = scmp.ne.s32.totalorder %s63, %s65
      %p69 = scmp.eq.s32.totalorder %s15, 0
      %p70 = por %p68, %p69
      %p71 = scmp.ne.s32.totalorder %s63, %s65
      %p72 = scmp.eq.s32.totalorder %s20, 1
      %p73 = por %p71, %p72
      %p74 = scmp.ne.s32.totalorder %s65, %s66
      %p75 = scmp.eq.s32.totalorder %s20, 0
      %p76 = por %p74, %p75
      %p77 = scmp.ne.s32.totalorder %s65, %s66
      %p78 = scmp.eq.s32.totalorder %s21, 1
      %p79 = por %p77, %p78
      %p81 = scmp.ne.s32.totalorder %s66, %s80
      %p82 = scmp.eq.s32.totalorder %s21, 0
      %p83 = por %p81, %p82
      %s85 = sadd.s32 %s84, 1
      %p88 = scmp.eq.s32.totalorder %s15, 1
      %p89 = scmp.ne.s32.totalorder %s84, %s86
      %p90 = scmp.eq.s32.totalorder %s15, 0
      %p91 = por %p89, %p90
      %p92 = scmp.ne.s32.totalorder %s84, %s86
      %p93 = scmp.eq.s32.totalorder %s20, 1
      %p94 = por %p92, %p93
      %p95 = scmp.ne.s32.totalorder %s86, %s87
      %p96 = scmp.eq.s32.totalorder %s20, 0
      %p97 = por %p95, %p96
      %p98 = scmp.ne.s32.totalorder %s86, %s87
      %p99 = scmp.eq.s32.totalorder %s21, 1
      %p100 = por %p98, %p99
      %p102 = scmp.ne.s32.totalorder %s87, %s101
      %p103 = scmp.eq.s32.totalorder %s21, 0
      %p104 = por %p102, %p103
      %s105 = ssub.s32 %s22, %s34
      %s106 = ssub.s32 %s23, %s30
      %s107 = sor.u32 %s105, %s106
      %p108 = scmp.eq.s32.totalorder %s107, 0
      %s110 = sadd.s32 %s109, 1
      %s111 = scalar_select %p108, %s109, %s110
      %p114 = pneg %p108
      %p115 = scmp.eq.s32.totalorder %s15, 1
      %p116 = por %p114, %p115
      %p117 = scmp.ne.s32.totalorder %s109, %s112
      %p118 = scmp.eq.s32.totalorder %s15, 0
      %p119 = por %p117, %p118
      %p120 = scmp.ne.s32.totalorder %s109, %s112
      %p121 = scmp.eq.s32.totalorder %s20, 1
      %p122 = por %p120, %p121
      %p123 = scmp.ne.s32.totalorder %s112, %s113
      %p124 = scmp.eq.s32.totalorder %s20, 0
      %p125 = por %p123, %p124
      %p126 = scmp.ne.s32.totalorder %s112, %s113
      %p127 = scmp.eq.s32.totalorder %s21, 1
      %p128 = por %p126, %p127
      %p130 = scmp.ne.s32.totalorder %s113, %s129
      %p131 = scmp.eq.s32.totalorder %s21, 0
      %p132 = por %p130, %p131
      %p133 = scmp.le.s32.totalorder 1, %s15
      %p134 = scmp.lt.s32.totalorder %s15, 3
      %p135 = pnand %p133, %p134
      %p136 = pneg %p135
      // Predicated region
      $region9: #{tpu_custom_call.1} parent=5 // pred_check
        _
      $region10: #{tpu_custom_call.1} parent=5 // pred_check_branch
        %138 = sbr.rel (%p135) target = $region12
      $region11: #{tpu_custom_call.1} parent=5 // pred_region
        %s139 = ssub.s32 %s15, 1
        // Predicated region
        $region13: #{tpu_custom_call.1} parent=11 // pred_check
          %p140 = pneg %p76
        $region14: #{tpu_custom_call.1} parent=11 // pred_check_branch
          %142 = sbr.rel (%p140) target = $region16
        $region15: #{tpu_custom_call.1} parent=11 // pred_region
          _
        $region16: #{tpu_custom_call.1} parent=11 // pred_fallthru
          _
        // Predicated region
        $region17: #{tpu_custom_call.1} parent=11 // pred_check
          %p143 = pneg %p97
        $region18: #{tpu_custom_call.1} parent=11 // pred_check_branch
          %145 = sbr.rel (%p143) target = $region20
        $region19: #{tpu_custom_call.1} parent=11 // pred_region
          _
        $region20: #{tpu_custom_call.1} parent=11 // pred_fallthru
          _
      $region12: #{tpu_custom_call.1} parent=5 // pred_fallthru
        _
      %p146 = scmp.lt.s32.totalorder %s15, 2
      // Predicated region
      $region21: #{tpu_custom_call.1} parent=5 // pred_check
        %p147 = pneg %p146
      $region22: #{tpu_custom_call.1} parent=5 // pred_check_branch
        %149 = sbr.rel (%p147) target = $region24
      $region23: #{tpu_custom_call.1} parent=5 // pred_region
        // Predicated region
        $region25: #{tpu_custom_call.1} parent=23 // pred_check
          %p150 = pneg %p49
        $region26: #{tpu_custom_call.1} parent=23 // pred_check_branch
          %152 = sbr.rel (%p150) target = $region28
        $region27: #{tpu_custom_call.1} parent=23 // pred_region
          %s153 = sand.u32 %s39, 1
          %s154 = scalar_lea.sflag [#allocation3], %s153
          %s155 = sand.u32 %s39, 1
          %s156 = smul.addr %s155, 8
          %s157 = scalar_lea.vmem [#allocation2], %s156
          %s158 = smul.u32 2, %s23
          %s160 = ssub.s32 128, 128
          %161 = vsyncadd %s154, %s160
          %s162 = smul.addr %s22, 2
          %s163 = sadd.s32 %s158, %s162
          %s164 = smul.addr %s163, 64
          %s165 = scalar_lea.hbm %s0, %s164
          %s167 = sshll.u32 %s157, 4
          %s168 = int_to_ptr.vmem [resolvable:$true] %s167
          %170 = dma.hbm_to_vmem [thread:$0]  %s165, 128, %s168, %s154
        $region28: #{tpu_custom_call.1} parent=23 // pred_fallthru
          _
      $region24: #{tpu_custom_call.1} parent=5 // pred_fallthru
        _
      %p171 = scmp.le.s32.totalorder 1, %s15
      %p172 = scmp.lt.s32.totalorder %s15, 3
      %p173 = pnand %p171, %p172
      %p174 = pneg %p173
      // Predicated region
      $region29: #{tpu_custom_call.1} parent=5 // pred_check
        _
      $region30: #{tpu_custom_call.1} parent=5 // pred_check_branch
        %176 = sbr.rel (%p173) target = $region32
      $region31: #{tpu_custom_call.1} parent=5 // pred_region
        %s177 = ssub.s32 %s15, 1
        %s178 = sand.u32 %s42, 1
        %s179 = scalar_lea.sflag [#allocation3], %s178
        %s180 = sand.u32 %s42, 1
        %s181 = smul.addr %s180, 8
        %s182 = scalar_lea.vmem [#allocation2], %s181
        // Predicated region
        $region33: #{tpu_custom_call.1} parent=31 // pred_check
          %p183 = pneg %p55
        $region34: #{tpu_custom_call.1} parent=31 // pred_check_branch
          %185 = sbr.rel (%p183) target = $region36
        $region35: #{tpu_custom_call.1} parent=31 // pred_region
          %186 = dma.done %s179, 128
        $region36: #{tpu_custom_call.1} parent=31 // pred_fallthru
          _
        %s187 = sand.u32 %s42, 1
        %s188 = scalar_lea.sflag [#allocation3], %s187
        %s189 = sand.u32 %s42, 1
        %s190 = smul.addr %s189, 8
        %s191 = scalar_lea.vmem [#allocation2], %s190
        %p192 = pneg %p55
        %p193 = pneg %p52
        %p194 = pneg %p76
        %p195 = pneg %p73
        %p196 = pneg %p97
        %p197 = pneg %p94
        %p198 = pneg %p125
        %p199 = pneg %p122
        %s200 = sand.u32 %s112, 1
        %s201 = scalar_lea.sflag [#allocation4], %s200
        %s202 = sand.u32 %s112, 1
        %s203 = smul.addr %s202, 8
        %s204 = scalar_lea.vmem [#allocation5], %s203
        %s205 = smul.u32 2, %s25
        %s206 = smul.u32 2, %s25
        %v207 = vld [vmem:[%s182] sm:$0xff]
        %v208 = vld [vmem:[%s2] sm:$0xf]
        %v209 = vld [vmem:[%s1] sm:$0xf]
        %211 = vset.pattern.permute.xlu0 0
        %212 = vperm.xlu0 %211, %v209
        %v213 = vpop.permute.xlu0 %212
        %v216 = vlaneseq
        %v217 = vshrl.u32 %v216, 7
        %v218 = vsub.s32 0, %v217
        %v219 = vrot.slane %v207, %v218
        %v220 = vlaneseq
        %v221 = vshrl.u32 %v220, 7
        %v222 = vsub.s32 4, %v221
        %v223 = vrot.slane %v207, %v222
        %v226 = vlaneseq
        %v227 = vshrl.u32 %v226, 7
        %v228 = vsub.s32 0, %v227
        %v229 = vrot.slane %v219, %v228
        %v230 = vlaneseq
        %v231 = vshrl.u32 %v230, 7
        %v232 = vsub.s32 0, %v231
        %v233 = vrot.slane %v223, %v232
        %v234 = vmul.f32 %v213, %v229
        %v235 = vmul.f32 %v213, %v233
        %237 = vset.pattern.permute.xlu0 0
        %238 = vperm.xlu0 %237, %v208
        %v239 = vpop.permute.xlu0 %238
        %v241 = vadd.f32 %v239, %v234
        %v242 = vadd.f32 %v239, %v235
        %243 = vset.pattern.permute.xlu0 1
        %244 = vperm.xlu0 %243, %v209
        %v245 = vpop.permute.xlu0 %244
        %v247 = vlaneseq
        %v248 = vshrl.u32 %v247, 7
        %v249 = vsub.s32 1, %v248
        %v250 = vrot.slane %v207, %v249
        %v251 = vlaneseq
        %v252 = vshrl.u32 %v251, 7
        %v253 = vsub.s32 5, %v252
        %v254 = vrot.slane %v207, %v253
        %v257 = vlaneseq
        %v258 = vshrl.u32 %v257, 7
        %v259 = vsub.s32 1, %v258
        %v260 = vrot.slane %v250, %v259
        %v261 = vlaneseq
        %v262 = vshrl.u32 %v261, 7
        %v263 = vsub.s32 1, %v262
        %v264 = vrot.slane %v254, %v263
        %v265 = vmul.f32 %v245, %v260
        %v266 = vmul.f32 %v245, %v264
        %v267 = vadd.f32 %v241, %v265
        %v268 = vadd.f32 %v242, %v266
        %269 = vset.pattern.permute.xlu0 2
        %270 = vperm.xlu0 %269, %v209
        %v271 = vpop.permute.xlu0 %270
        %v273 = vlaneseq
        %v274 = vshrl.u32 %v273, 7
        %v275 = vsub.s32 2, %v274
        %v276 = vrot.slane %v207, %v275
        %v277 = vlaneseq
        %v278 = vshrl.u32 %v277, 7
        %v279 = vsub.s32 6, %v278
        %v280 = vrot.slane %v207, %v279
        %v283 = vlaneseq
        %v284 = vshrl.u32 %v283, 7
        %v285 = vsub.s32 2, %v284
        %v286 = vrot.slane %v276, %v285
        %v287 = vlaneseq
        %v288 = vshrl.u32 %v287, 7
        %v289 = vsub.s32 2, %v288
        %v290 = vrot.slane %v280, %v289
        %v291 = vmul.f32 %v271, %v286
        %v292 = vmul.f32 %v271, %v290
        %v293 = vadd.f32 %v267, %v291
        %v294 = vadd.f32 %v268, %v292
        %295 = vset.pattern.permute.xlu0 3
        %296 = vperm.xlu0 %295, %v209
        %v297 = vpop.permute.xlu0 %296
        %v299 = vlaneseq
        %v300 = vshrl.u32 %v299, 7
        %v301 = vsub.s32 3, %v300
        %v302 = vrot.slane %v207, %v301
        %v303 = vlaneseq
        %v304 = vshrl.u32 %v303, 7
        %v305 = vsub.s32 7, %v304
        %v306 = vrot.slane %v207, %v305
        %v309 = vlaneseq
        %v310 = vshrl.u32 %v309, 7
        %v311 = vsub.s32 3, %v310
        %v312 = vrot.slane %v302, %v311
        %v313 = vlaneseq
        %v314 = vshrl.u32 %v313, 7
        %v315 = vsub.s32 3, %v314
        %v316 = vrot.slane %v306, %v315
        %v317 = vmul.f32 %v297, %v312
        %v318 = vmul.f32 %v297, %v316
        %v319 = vadd.f32 %v293, %v317
        %v320 = vadd.f32 %v294, %v318
        %v321 = vcombine.high %v207, %v207
        %v323 = vadd.f32 %v319, %v207
        %v324 = vadd.f32 %v320, %v321
        %v327 = vcombine.low %v323, %v324
        %329 = vst [vmem:[%s204] sm:$0xff] %v327
        %s330 = sand.u32 %s112, 1
        %s331 = scalar_lea.sflag [#allocation4], %s330
        %s332 = sand.u32 %s112, 1
        %s333 = smul.addr %s332, 8
        %s334 = scalar_lea.vmem [#allocation5], %s333
        // Predicated region
        $region37: #{tpu_custom_call.1} parent=31 // pred_check
          %p335 = pneg %p122
        $region38: #{tpu_custom_call.1} parent=31 // pred_check_branch
          %337 = sbr.rel (%p335) target = $region40
        $region39: #{tpu_custom_call.1} parent=31 // pred_region
          %s338 = smul.u32 2, %s25
          %s340 = ssub.s32 128, 128
          %341 = vsyncadd %s331, %s340
          %s342 = smul.addr %s24, 2
          %s343 = sadd.s32 %s338, %s342
          %s344 = smul.addr %s343, 64
          %s345 = scalar_lea.hbm %s3, %s344
          %s347 = sshll.u32 %s334, 4
          %s348 = int_to_ptr.vmem [resolvable:$true] %s347
          %350 = dma.vmem_to_hbm [thread:$0]  %s348, 128, %s345, %s331
        $region40: #{tpu_custom_call.1} parent=31 // pred_fallthru
          _
      $region32: #{tpu_custom_call.1} parent=5 // pred_fallthru
        _
      %p351 = scmp.le.s32.totalorder 2, %s15
      // Predicated region
      $region41: #{tpu_custom_call.1} parent=5 // pred_check
        %p352 = pneg %p351
      $region42: #{tpu_custom_call.1} parent=5 // pred_check_branch
        %354 = sbr.rel (%p352) target = $region44
      $region43: #{tpu_custom_call.1} parent=5 // pred_region
        %s355 = ssub.s32 %s15, 2
        // Predicated region
        $region45: #{tpu_custom_call.1} parent=43 // pred_check
          %p356 = pneg %p128
        $region46: #{tpu_custom_call.1} parent=43 // pred_check_branch
          %358 = sbr.rel (%p356) target = $region48
        $region47: #{tpu_custom_call.1} parent=43 // pred_region
          %s359 = sand.u32 %s113, 1
          %s360 = scalar_lea.sflag [#allocation4], %s359
          %s361 = sand.u32 %s113, 1
          %s362 = smul.addr %s361, 8
          %s363 = scalar_lea.vmem [#allocation5], %s362
          %364 = dma.done %s360, 128
        $region48: #{tpu_custom_call.1} parent=43 // pred_fallthru
          _
      $region44: #{tpu_custom_call.1} parent=5 // pred_fallthru
        _
    $region6: #{tpu_custom_call.1} parent=1 // loop_footer
      %s19 = sadd.s32 1, %s15
    $region7: #{tpu_custom_call.1} parent=1 // loop_footer_branch
      %14 = sbr.rel target = $region3
    $region8: #{tpu_custom_call.1} parent=1 // loop_exit
      _
    %365 = vsyncpa [#allocation3], 1
    %s366 = scalar_lea.sflag [#allocation3], 1
    %367 = vsyncpa %s366, 1
    %368 = vsyncpa [#allocation4], 1
    %s369 = scalar_lea.sflag [#allocation4], 1
    %370 = vsyncpa %s369, 1

</llo_original>
